<compile_context>
chip_gen: v7x
topology: tpu7x:2x2x1
jax: 0.10.0
libtpu: 0.0.40
codegen_flags: <defaults>
</compile_context>

<pallas_src>
import jax
import jax.numpy as jnp
from jax.experimental import pallas as pl
from jax.experimental.pallas import tpu as pltpu

# ---- dimensions (small analog of the original module) ----
B, C, L = 2, 4, 16          # batch, in_channels (X_train.shape[1]), seq len (X_train.shape[2])
K, O = 8, 8                 # conv kernel_size (2500 analog), out_channels = 8
T = L - K + 1               # conv_output_size
F = O * T                   # flattened features = 8 * conv_output_size
H1 = 50                     # fc1 hidden units
NC = 3                      # y_train.shape[1] analog (number of outputs)


def cnn1d_fused_kernel(x_ref, wt_ref, bcf_ref, w12_ref, b12_ref, o_ref):
    """Fused Conv1d(valid) + ReLU + Flatten + fc1 + fc2 for the whole batch.

    x_ref:   (B, C*L)   flattened input
    wt_ref:  (C*L, F)   Toeplitz conv weight (im2col + flatten folded in)
    bcf_ref: (1, F)     conv bias broadcast to flattened-feature layout (o*T + t)
    w12_ref: (F, NC)    fused fc1 @ fc2 weight
    b12_ref: (1, NC)    fused fc bias
    o_ref:   (B, NC)
    """
    # Conv1d over the whole batch as ONE GEMM; bias + ReLU on the VPU (f32).
    h = jnp.dot(x_ref[...], wt_ref[...], preferred_element_type=jnp.float32)   # (B, F)
    h = jnp.maximum(h + bcf_ref[...], 0.0)
    # fc1 + fc2 fused into one GEMM (exact: no activation between them).
    o_ref[...] = jnp.dot(h, w12_ref[...], preferred_element_type=jnp.float32) + b12_ref[...]


def prepare_params(wc, bc, w1, b1, w2, b2):
    """One-time (hoisted) re-layout of the PyTorch-layout parameters.

    TODO(synk): at real K=2500, replace the dense Toeplitz weight with a K-tiled
    grid reduction (see NOTE at top); the dense form is only valid at toy scale.
    """
    # 1) Toeplitz conv weight: Wt[c*L + l, o*T + t] = wc[o, c, l - t] for 0 <= l-t < K.
    #    This folds im2col AND nn.Flatten's (o*T + t) ordering into the weight.
    wc_clo = jnp.transpose(wc, (1, 2, 0))                       # (C, K, O)
    cols = []
    for t in range(T):                                          # static, T == 9; runs once
        blk = jnp.zeros((C, L, O), jnp.float32).at[:, t:t + K, :].set(wc_clo)
        cols.append(blk)
    wt = jnp.stack(cols, axis=-1).reshape(C * L, O * T)         # (C*L, F)

    # 2) Conv bias in flattened-feature layout: bcf[o*T + t] = bc[o].
    bcf = jnp.repeat(bc, T).reshape(1, F)

    # 3) Algebraic fusion of fc1, fc2 (PyTorch layouts: w1 (H1,F), w2 (NC,H1)).
    w12 = w1.T @ w2.T                                           # (F, NC)
    b12 = (b1 @ w2.T + b2).reshape(1, NC)

    return wt, bcf, w12, b12


def cnn1d_forward(x, params):
    wt, bcf, w12, b12 = params
    xflat = x.reshape(B, C * L)      # contiguous NCL flatten -- free metadata reshape
    return pl.pallas_call(
        cnn1d_fused_kernel,
        out_shape=jax.ShapeDtypeStruct((B, NC), jnp.float32),
        grid=(1,),
        in_specs=[
            pl.BlockSpec((B, C * L), lambda i: (0, 0)),
            pl.BlockSpec((C * L, F), lambda i: (0, 0)),
            pl.BlockSpec((1, F), lambda i: (0, 0)),
            pl.BlockSpec((F, NC), lambda i: (0, 0)),
            pl.BlockSpec((1, NC), lambda i: (0, 0)),
        ],
        out_specs=pl.BlockSpec((B, NC), lambda i: (0, 0)),
        compiler_params=pltpu.CompilerParams(dimension_semantics=("arbitrary",)),
    )(xflat, wt, bcf, w12, b12)


def ref_forward(x, wc, bc, w1, b1, w2, b2):
    """Pure-JAX reference of the PyTorch forward pass (un-fused)."""
    conv = jax.lax.conv_general_dilated(
        x, wc, window_strides=(1,), padding="VALID",
        dimension_numbers=("NCH", "OIH", "NCH")) + bc.reshape(1, O, 1)
    conv = jnp.maximum(conv, 0.0)
    h = conv.reshape(B, -1)
    y1 = h @ w1.T + b1
    return y1 @ w2.T + b2


if __name__ == "__main__":
    key = jax.random.PRNGKey(0)
    kx, kwc, kbc, kw1, kb1, kw2, kb2 = jax.random.split(key, 7)

    x = jax.random.normal(kx, (B, C, L), dtype=jnp.float32)

    # Deterministic parameter init (PyTorch-style uniform bounds), PyTorch layouts.
    bc_bound = 1.0 / (C * K) ** 0.5
    wc = jax.random.uniform(kwc, (O, C, K), jnp.float32, -bc_bound, bc_bound)
    bc = jax.random.uniform(kbc, (O,), jnp.float32, -bc_bound, bc_bound)
    b1_bound = 1.0 / F ** 0.5
    w1 = jax.random.uniform(kw1, (H1, F), jnp.float32, -b1_bound, b1_bound)
    b1 = jax.random.uniform(kb1, (H1,), jnp.float32, -b1_bound, b1_bound)
    b2_bound = 1.0 / H1 ** 0.5
    w2 = jax.random.uniform(kw2, (NC, H1), jnp.float32, -b2_bound, b2_bound)
    b2 = jax.random.uniform(kb2, (NC,), jnp.float32, -b2_bound, b2_bound)

    params = jax.tree_util.tree_map(jax.block_until_ready,
                                    prepare_params(wc, bc, w1, b1, w2, b2))

    out = jax.block_until_ready(cnn1d_forward(x, params))
    ref = jax.block_until_ready(ref_forward(x, wc, bc, w1, b1, w2, b2))

    assert out.shape == (B, NC), out.shape
    assert jnp.allclose(out, ref, atol=1e-4, rtol=1e-4), (out, ref)
    print("KERNEL_OK")
</pallas_src>

<mosaic_0001>
module attributes {stable_mosaic.version = 11 : i64} {
  func.func @cnn1d_fused_kernel(%arg0: i32, %arg1: memref<2x64xf32, #tpu.memory_space<vmem>>, %arg2: memref<64x72xf32, #tpu.memory_space<vmem>>, %arg3: memref<1x72xf32, #tpu.memory_space<vmem>>, %arg4: memref<72x3xf32, #tpu.memory_space<vmem>>, %arg5: memref<1x3xf32, #tpu.memory_space<vmem>>, %arg6: memref<2x3xf32, #tpu.memory_space<vmem>>) attributes {dimension_semantics = [#tpu.dimension_semantics<arbitrary>], iteration_bounds = array<i64: 1>, scalar_prefetch = 0 : i64, scratch_operands = 0 : i64, tpu.core_type = #tpu.core_type<tc>, window_params = [{pipeline_mode = #tpu.pipeline_mode<synchronous>, transform_indices = @transform_0, window_bounds = array<i64: 2, 64>}, {pipeline_mode = #tpu.pipeline_mode<synchronous>, transform_indices = @transform_1, window_bounds = array<i64: 64, 72>}, {pipeline_mode = #tpu.pipeline_mode<synchronous>, transform_indices = @transform_2, window_bounds = array<i64: 1, 72>}, {pipeline_mode = #tpu.pipeline_mode<synchronous>, transform_indices = @transform_3, window_bounds = array<i64: 72, 3>}, {pipeline_mode = #tpu.pipeline_mode<synchronous>, transform_indices = @transform_4, window_bounds = array<i64: 1, 3>}, {pipeline_mode = #tpu.pipeline_mode<synchronous>, transform_indices = @transform_5, window_bounds = array<i64: 2, 3>}]} {
    %c0 = arith.constant 0 : index
    %c0_0 = arith.constant 0 : index
    %0 = vector.load %arg1[%c0, %c0_0] : memref<2x64xf32, #tpu.memory_space<vmem>>, vector<2x64xf32>
    %c0_1 = arith.constant 0 : index
    %c0_2 = arith.constant 0 : index
    %1 = vector.load %arg2[%c0_1, %c0_2] : memref<64x72xf32, #tpu.memory_space<vmem>>, vector<64x72xf32>
    %cst = arith.constant dense<0.000000e+00> : vector<2x72xf32>
    %2 = tpu.matmul %0, %1, %cst {dimension_numbers = #tpu.dot_dimension_numbers<[1], [0], [0], [1], [0, 0, 1, 1], [], []>} : vector<2x64xf32>, vector<64x72xf32>, vector<2x72xf32> -> vector<2x72xf32>
    %c0_3 = arith.constant 0 : index
    %c0_4 = arith.constant 0 : index
    %3 = vector.load %arg3[%c0_3, %c0_4] : memref<1x72xf32, #tpu.memory_space<vmem>>, vector<1x72xf32>
    %4 = vector.broadcast %3 : vector<1x72xf32> to vector<2x72xf32>
    %5 = arith.addf %2, %4 : vector<2x72xf32>
    %cst_5 = arith.constant 0.000000e+00 : f32
    %6 = vector.broadcast %cst_5 : f32 to vector<2x72xf32>
    %7 = arith.maximumf %5, %6 : vector<2x72xf32>
    %c0_6 = arith.constant 0 : index
    %c0_7 = arith.constant 0 : index
    %8 = vector.load %arg4[%c0_6, %c0_7] : memref<72x3xf32, #tpu.memory_space<vmem>>, vector<72x3xf32>
    %cst_8 = arith.constant dense<0.000000e+00> : vector<2x3xf32>
    %9 = tpu.matmul %7, %8, %cst_8 {dimension_numbers = #tpu.dot_dimension_numbers<[1], [0], [0], [1], [0, 0, 1, 1], [], []>} : vector<2x72xf32>, vector<72x3xf32>, vector<2x3xf32> -> vector<2x3xf32>
    %c0_9 = arith.constant 0 : index
    %c0_10 = arith.constant 0 : index
    %10 = vector.load %arg5[%c0_9, %c0_10] : memref<1x3xf32, #tpu.memory_space<vmem>>, vector<1x3xf32>
    %11 = vector.broadcast %10 : vector<1x3xf32> to vector<2x3xf32>
    %12 = arith.addf %9, %11 : vector<2x3xf32>
    %c0_11 = arith.constant 0 : index
    %c0_12 = arith.constant 0 : index
    %13 = vector.load %arg6[%c0_11, %c0_12] : memref<2x3xf32, #tpu.memory_space<vmem>>, vector<2x3xf32>
    tpu.vector_store %arg6[%c0_11, %c0_12], %12 {strides = array<i32>} : memref<2x3xf32, #tpu.memory_space<vmem>>, vector<2x3xf32>,
    return
  }
  func.func @transform_0(%arg0: i32) -> (i32, i32) {
    %c0_i32 = arith.constant 0 : i32
    %c0_i32_0 = arith.constant 0 : i32
    %c0_i32_1 = arith.constant 0 : i32
    return %c0_i32, %c0_i32_0 : i32, i32
  }
  func.func @transform_1(%arg0: i32) -> (i32, i32) {
    %c0_i32 = arith.constant 0 : i32
    %c0_i32_0 = arith.constant 0 : i32
    %c0_i32_1 = arith.constant 0 : i32
    return %c0_i32, %c0_i32_0 : i32, i32
  }
  func.func @transform_2(%arg0: i32) -> (i32, i32) {
    %c0_i32 = arith.constant 0 : i32
    %c0_i32_0 = arith.constant 0 : i32
    %c0_i32_1 = arith.constant 0 : i32
    return %c0_i32, %c0_i32_0 : i32, i32
  }
  func.func @transform_3(%arg0: i32) -> (i32, i32) {
    %c0_i32 = arith.constant 0 : i32
    %c0_i32_0 = arith.constant 0 : i32
    %c0_i32_1 = arith.constant 0 : i32
    return %c0_i32, %c0_i32_0 : i32, i32
  }
  func.func @transform_4(%arg0: i32) -> (i32, i32) {
    %c0_i32 = arith.constant 0 : i32
    %c0_i32_0 = arith.constant 0 : i32
    %c0_i32_1 = arith.constant 0 : i32
    return %c0_i32, %c0_i32_0 : i32, i32
  }
  func.func @transform_5(%arg0: i32) -> (i32, i32) {
    %c0_i32 = arith.constant 0 : i32
    %c0_i32_0 = arith.constant 0 : i32
    %c0_i32_1 = arith.constant 0 : i32
    return %c0_i32, %c0_i32_0 : i32, i32
  }
}

</mosaic_0001>

<llo_original>
// kernel: tpu_custom_call.1
$region0: #{tpu_custom_call.1}
  #allocation0 [shape = 'u32[]', space=smem, size = 0x4, offset = 0x4, fixed_abs, tag = 'smem constant byte address 0x4 - core index']
  #allocation1 [shape = 'u32[144,128]{1,0:T(1,128)}', space=vmem, size = 0x12000, scoped, tag = 'internal scratch']
  %s0 = inlined_call_operand.vmem [shape: f32[2,64], index: 0, kind: input, shape index: {}]
  %s1 = inlined_call_operand.vmem [shape: f32[64,72], index: 1, kind: input, shape index: {}]
  %s2 = inlined_call_operand.vmem [shape: f32[1,72], index: 2, kind: input, shape index: {}]
  %s3 = inlined_call_operand.vmem [shape: f32[72,3], index: 3, kind: input, shape index: {}]
  %s4 = inlined_call_operand.vmem [shape: f32[1,3], index: 4, kind: input, shape index: {}]
  %s5 = inlined_call_operand.hbm [shape: f32[2,3], index: 5, kind: output, shape index: {}]
  %s6 = sld [smem:[#allocation0]]
  $region30: #{tpu_custom_call.1} parent=0
    _
  %s8 = ssub.s32 1, %s6
  %s9 = scalar_select 0, %s8, %s6
  $region1: #{tpu_custom_call.1} parent=0
    #allocation2 [shape = 'u8[1024]{0}', space=vmem, size = 0x400, scoped, tag = 'output window, operand 0, single buffered']
    #allocation3 [shape = 's32[1]{0}', space=sflag, size = 0x4, scoped, tag = 'scoped memory for tpu_custom_call.1']
    %10 = vsyncpa [#allocation3], 0
    // Predicated region
    $region2: #{tpu_custom_call.1} parent=1 // pred_check
      _
    $region3: #{tpu_custom_call.1} parent=1 // pred_check_branch
      %12 = sbr.rel (0) target = $region5
    $region4: #{tpu_custom_call.1} parent=1 // pred_region
      _
    $region5: #{tpu_custom_call.1} parent=1 // pred_fallthru
      _
    // Predicated region
    $region6: #{tpu_custom_call.1} parent=1 // pred_check
      _
    $region7: #{tpu_custom_call.1} parent=1 // pred_check_branch
      %14 = sbr.rel (0) target = $region9
    $region8: #{tpu_custom_call.1} parent=1 // pred_region
      _
    $region9: #{tpu_custom_call.1} parent=1 // pred_fallthru
      _
    // Predicated region
    $region10: #{tpu_custom_call.1} parent=1 // pred_check
      _
    $region11: #{tpu_custom_call.1} parent=1 // pred_check_branch
      %16 = sbr.rel (0) target = $region13
    $region12: #{tpu_custom_call.1} parent=1 // pred_region
      _
    $region13: #{tpu_custom_call.1} parent=1 // pred_fallthru
      _
    // Predicated region
    $region14: #{tpu_custom_call.1} parent=1 // pred_check
      _
    $region15: #{tpu_custom_call.1} parent=1 // pred_check_branch
      %18 = sbr.rel (0) target = $region17
    $region16: #{tpu_custom_call.1} parent=1 // pred_region
      _
    $region17: #{tpu_custom_call.1} parent=1 // pred_fallthru
      _
    // Predicated region
    $region18: #{tpu_custom_call.1} parent=1 // pred_check
      _
    $region19: #{tpu_custom_call.1} parent=1 // pred_check_branch
      %20 = sbr.rel (0) target = $region21
    $region20: #{tpu_custom_call.1} parent=1 // pred_region
      _
    $region21: #{tpu_custom_call.1} parent=1 // pred_fallthru
      _
    %v21 = vld [vmem:[%s0] sm:$0x3]
    %v22 = vld [vmem:[%s1] sm:$0xff]
    %v23 = vld [vmem:[%s1 + $0x8] sm:$0xff]
    %v24 = vld [vmem:[%s1 + $0x10] sm:$0xff]
    %v25 = vld [vmem:[%s1 + $0x18] sm:$0xff]
    %v26 = vld [vmem:[%s1 + $0x20] sm:$0xff]
    %v27 = vld [vmem:[%s1 + $0x28] sm:$0xff]
    %v28 = vld [vmem:[%s1 + $0x30] sm:$0xff]
    %v29 = vld [vmem:[%s1 + $0x38] sm:$0xff]
    %v30 = vld [vmem:[%s2] sm:$0x1]
    %v32 = vlaneseq
    %v33 = vshrl.u32 %v32, 7
    %v34 = vsub.s32 0, %v33
    %v35 = vrot.slane %v30, %v34
    %vm37 = vcmask 523264
    %v39 = vsel %vm37, %v21, 0
    %41 = vmatprep.subr.mxu0 0.0
    %42 = vmatpush1.msra.mxu0 %v22
    %43 = vmatprep.subr.mxu0 0.0
    %44 = vmatpush1.msra.mxu0 %v23
    %45 = vmatprep.subr.mxu0 0.0
    %46 = vmatpush1.msra.mxu0 %v24
    %47 = vmatprep.subr.mxu0 0.0
    %48 = vmatpush1.msra.mxu0 %v25
    %49 = vmatprep.subr.mxu0 0.0
    %50 = vmatpush1.msra.mxu0 %v26
    %51 = vmatprep.subr.mxu0 0.0
    %52 = vmatpush1.msra.mxu0 %v27
    %53 = vmatprep.subr.mxu0 0.0
    %54 = vmatpush1.msra.mxu0 %v28
    %55 = vmatprep.subr.mxu0 0.0
    %56 = vmatpush1.msra.mxu0 %v29
    %57 = vmatprep.subr.mxu0 0.0
    %58 = vmatpush1.msra.mxu0 0.0
    %59 = vmatprep.subr.mxu0 0.0
    %60 = vmatpush1.msra.mxu0 0.0
    %61 = vmatprep.subr.mxu0 0.0
    %62 = vmatpush1.msra.mxu0 0.0
    %63 = vmatprep.subr.mxu0 0.0
    %64 = vmatpush1.msra.mxu0 0.0
    %65 = vmatprep.subr.mxu0 0.0
    %66 = vmatpush1.msra.mxu0 0.0
    %67 = vmatprep.subr.mxu0 0.0
    %68 = vmatpush1.msra.mxu0 0.0
    %69 = vmatprep.subr.mxu0 0.0
    %70 = vmatpush1.msra.mxu0 0.0
    %71 = vmatprep.subr.mxu0 0.0
    %72 = vmatpush1.msra.mxu0 0.0
    %73 = vmatprep.subr.mxu0 0.0
    %74 = vmatpush1.msra.mxu0 0.0
    %75 = vmatprep.subr.mxu0 0.0
    %76 = vmatpush1.msra.mxu0 0.0
    %77 = vmatprep.subr.mxu0 0.0
    %78 = vmatpush1.msra.mxu0 0.0
    %79 = vmatprep.subr.mxu0 0.0
    %80 = vmatpush1.msra.mxu0 0.0
    %81 = vmatprep.subr.mxu0 0.0
    %82 = vmatpush1.msra.mxu0 0.0
    %83 = vmatprep.subr.mxu0 0.0
    %84 = vmatpush1.msra.mxu0 0.0
    %85 = vmatprep.subr.mxu0 0.0
    %86 = vmatpush1.msra.mxu0 0.0
    %87 = vmatprep.subr.mxu0 0.0
    %88 = vmatpush1.msra.mxu0 0.0
    %89 = vmatprep.subr.mxu0 0.0
    %90 = vmatpush1.msra.mxu0 0.0
    %91 = vmatprep.subr.mxu0 0.0
    %92 = vmatpush1.msra.mxu0 0.0
    %93 = vmatprep.subr.mxu0 0.0
    %94 = vmatpush1.msra.mxu0 0.0
    %95 = vmatprep.subr.mxu0 0.0
    %96 = vmatpush1.msra.mxu0 0.0
    %97 = vmatprep.subr.mxu0 0.0
    %98 = vmatpush1.msra.mxu0 0.0
    %99 = vmatprep.subr.mxu0 0.0
    %100 = vmatpush1.msra.mxu0 0.0
    %101 = vmatprep.subr.mxu0 0.0
    %102 = vmatpush1.msra.mxu0 0.0
    %103 = vmatprep.subr.mxu0 0.0
    %104 = vmatpush1.msra.mxu0 0.0
    %105 = vmatprep.mubr.f32.mxu0 0.0
    %106 = vmatmul.mubr.f32.gmra.mrb[0].mxu0 %v39
    %v107 = vpop.f32.mrb[0].mxu0
    %v108 = vadd.f32 %v35, %v107
    %v109 = vpop.f32.mrb[0].mxu0
    %110 = vdwg.mxu0
    %v111 = vmax.f32 %v108, 0.0
    %v112 = vld [vmem:[%s3] sm:$0xff]
    %v113 = vld [vmem:[%s3 + $0x8] sm:$0xff]
    %v114 = vld [vmem:[%s3 + $0x10] sm:$0xff]
    %v115 = vld [vmem:[%s3 + $0x18] sm:$0xff]
    %v116 = vld [vmem:[%s3 + $0x20] sm:$0xff]
    %v117 = vld [vmem:[%s3 + $0x28] sm:$0xff]
    %v118 = vld [vmem:[%s3 + $0x30] sm:$0xff]
    %v119 = vld [vmem:[%s3 + $0x38] sm:$0xff]
    %v120 = vld [vmem:[%s3 + $0x40] sm:$0xff]
    %v121 = vld [vmem:[%s4] sm:$0x1]
    %v123 = vlaneseq
    %v124 = vshrl.u32 %v123, 7
    %v125 = vsub.s32 0, %v124
    %v126 = vrot.slane %v121, %v125
    %vm128 = vcmask 588800
    %v130 = vsel %vm128, %v111, 0
    %132 = vmatprep.subr.mxu0 0.0
    %133 = vmatpush1.msra.mxu0 %v112
    %134 = vmatprep.subr.mxu0 0.0
    %135 = vmatpush1.msra.mxu0 %v113
    %136 = vmatprep.subr.mxu0 0.0
    %137 = vmatpush1.msra.mxu0 %v114
    %138 = vmatprep.subr.mxu0 0.0
    %139 = vmatpush1.msra.mxu0 %v115
    %140 = vmatprep.subr.mxu0 0.0
    %141 = vmatpush1.msra.mxu0 %v116
    %142 = vmatprep.subr.mxu0 0.0
    %143 = vmatpush1.msra.mxu0 %v117
    %144 = vmatprep.subr.mxu0 0.0
    %145 = vmatpush1.msra.mxu0 %v118
    %146 = vmatprep.subr.mxu0 0.0
    %147 = vmatpush1.msra.mxu0 %v119
    %148 = vmatprep.subr.mxu0 0.0
    %149 = vmatpush1.msra.mxu0 %v120
    %150 = vmatprep.subr.mxu0 0.0
    %151 = vmatpush1.msra.mxu0 0.0
    %152 = vmatprep.subr.mxu0 0.0
    %153 = vmatpush1.msra.mxu0 0.0
    %154 = vmatprep.subr.mxu0 0.0
    %155 = vmatpush1.msra.mxu0 0.0
    %156 = vmatprep.subr.mxu0 0.0
    %157 = vmatpush1.msra.mxu0 0.0
    %158 = vmatprep.subr.mxu0 0.0
    %159 = vmatpush1.msra.mxu0 0.0
    %160 = vmatprep.subr.mxu0 0.0
    %161 = vmatpush1.msra.mxu0 0.0
    %162 = vmatprep.subr.mxu0 0.0
    %163 = vmatpush1.msra.mxu0 0.0
    %164 = vmatprep.subr.mxu0 0.0
    %165 = vmatpush1.msra.mxu0 0.0
    %166 = vmatprep.subr.mxu0 0.0
    %167 = vmatpush1.msra.mxu0 0.0
    %168 = vmatprep.subr.mxu0 0.0
    %169 = vmatpush1.msra.mxu0 0.0
    %170 = vmatprep.subr.mxu0 0.0
    %171 = vmatpush1.msra.mxu0 0.0
    %172 = vmatprep.subr.mxu0 0.0
    %173 = vmatpush1.msra.mxu0 0.0
    %174 = vmatprep.subr.mxu0 0.0
    %175 = vmatpush1.msra.mxu0 0.0
    %176 = vmatprep.subr.mxu0 0.0
    %177 = vmatpush1.msra.mxu0 0.0
    %178 = vmatprep.subr.mxu0 0.0
    %179 = vmatpush1.msra.mxu0 0.0
    %180 = vmatprep.subr.mxu0 0.0
    %181 = vmatpush1.msra.mxu0 0.0
    %182 = vmatprep.subr.mxu0 0.0
    %183 = vmatpush1.msra.mxu0 0.0
    %184 = vmatprep.subr.mxu0 0.0
    %185 = vmatpush1.msra.mxu0 0.0
    %186 = vmatprep.subr.mxu0 0.0
    %187 = vmatpush1.msra.mxu0 0.0
    %188 = vmatprep.subr.mxu0 0.0
    %189 = vmatpush1.msra.mxu0 0.0
    %190 = vmatprep.subr.mxu0 0.0
    %191 = vmatpush1.msra.mxu0 0.0
    %192 = vmatprep.subr.mxu0 0.0
    %193 = vmatpush1.msra.mxu0 0.0
    %194 = vmatprep.subr.mxu0 0.0
    %195 = vmatpush1.msra.mxu0 0.0
    %196 = vmatprep.mubr.f32.mxu0 0.0
    %197 = vmatmul.mubr.f32.gmra.mrb[0].mxu0 %v130
    %v198 = vpop.f32.mrb[0].mxu0
    %v199 = vadd.f32 %v126, %v198
    %v200 = vpop.f32.mrb[0].mxu0
    %201 = vdwg.mxu0
    %vm202 = vcmask 17408
    %203 = vst.msk [vmem:[#allocation2] sm:$0x3] %vm202, %v199
    // Predicated region
    $region22: #{tpu_custom_call.1} parent=1 // pred_check
      _
    $region23: #{tpu_custom_call.1} parent=1 // pred_check_branch
      %205 = sbr.rel (0) target = $region25
    $region24: #{tpu_custom_call.1} parent=1 // pred_region
      %s207 = ssub.s32 32, 32
      %208 = vsyncadd [#allocation3], %s207
      %s210 = sshll.u32 [#allocation2], 4
      %s211 = int_to_ptr.vmem [resolvable:$true] %s210
      %213 = dma.vmem_to_hbm [thread:$0]  %s211, 32, %s5, [#allocation3]
    $region25: #{tpu_custom_call.1} parent=1 // pred_fallthru
      _
    // Predicated region
    $region26: #{tpu_custom_call.1} parent=1 // pred_check
      _
    $region27: #{tpu_custom_call.1} parent=1 // pred_check_branch
      %215 = sbr.rel (0) target = $region29
    $region28: #{tpu_custom_call.1} parent=1 // pred_region
      %216 = dma.done [#allocation3], 32
    $region29: #{tpu_custom_call.1} parent=1 // pred_fallthru
      _
    %217 = vsyncpa [#allocation3], 1

</llo_original>
